<compile_context>
chip_gen: v7x
topology: tpu7x:2x2x1
jax: 0.10.0
libtpu: 0.0.40
codegen_flags: <defaults>
</compile_context>

<pallas_src>
import math

import jax
import jax.numpy as jnp
from jax.experimental import pallas as pl
from jax.experimental.pallas import tpu as pltpu

_LANE = 128
_NEG_FILL = -1e4          # sigmoid(-1e4) == 0.0 exactly in f32
_SMALL_PATH_BYTES = 512 * 1024


def _round_up(x, m):
    return ((x + m - 1) // m) * m


def _tpu_budget():
    """(per-stream block byte target, vmem_limit_bytes), by TPU generation."""
    try:
        info = pltpu.get_tpu_info()
        vmem = getattr(info, "vmem_capacity_bytes", 0) or 0
    except Exception:
        vmem = 0
    if vmem >= 96 * 1024 * 1024:                 # v5e / v6e: 128 MiB physical VMEM
        return 4 * 1024 * 1024, 64 * 1024 * 1024
    return 2 * 1024 * 1024, 32 * 1024 * 1024     # v7x (64 MiB) / unknown: conservative


# ---------------------------------------------------------------------------
# Kernels
# ---------------------------------------------------------------------------

def _dice_small_kernel(x_ref, t_ref, score_ref):
    """Single-block fused path (no weight): per-sample dice scores in-kernel."""
    p = jax.nn.sigmoid(x_ref[...].astype(jnp.float32))
    t = t_ref[...].astype(jnp.float32)
    inter = jnp.sum(p * t, axis=1, keepdims=True)
    ssum = jnp.sum(p + t, axis=1, keepdims=True)          # fused denominator
    score_ref[...] = 2.0 * (inter + 1.0) / (ssum + 1.0)


def _dice_small_w_kernel(x_ref, t_ref, w_ref, score_ref):
    """Single-block fused path with elementwise weight."""
    w = w_ref[...].astype(jnp.float32)
    p = jax.nn.sigmoid(x_ref[...].astype(jnp.float32)) * w
    t = t_ref[...].astype(jnp.float32) * w
    inter = jnp.sum(p * t, axis=1, keepdims=True)
    ssum = jnp.sum(p + t, axis=1, keepdims=True)
    score_ref[...] = 2.0 * (inter + 1.0) / (ssum + 1.0)


def _dice_rows_kernel(x_ref, t_ref, inter_ref, sum_ref):
    """Per-row partial sums (no weight). Block = [tile_m, row_d] complete rows."""
    tile_m, row_d = x_ref.shape
    inter = jnp.zeros((tile_m, _LANE), jnp.float32)
    ssum = jnp.zeros((tile_m, _LANE), jnp.float32)
    for j in range(row_d // _LANE):              # static unroll: lane-dense VPU adds
        sl = slice(j * _LANE, (j + 1) * _LANE)
        p = jax.nn.sigmoid(x_ref[:, sl].astype(jnp.float32))
        t = t_ref[:, sl].astype(jnp.float32)
        inter = inter + p * t
        ssum = ssum + (p + t)
    # One cross-lane (XLU) reduce per block; hidden under the next block's DMA.
    inter_ref[...] = jnp.sum(inter, axis=1, keepdims=True)
    sum_ref[...] = jnp.sum(ssum, axis=1, keepdims=True)


def _dice_rows_w_kernel(x_ref, t_ref, w_ref, inter_ref, sum_ref):
    """Per-row partial sums with elementwise weight."""
    tile_m, row_d = x_ref.shape
    inter = jnp.zeros((tile_m, _LANE), jnp.float32)
    ssum = jnp.zeros((tile_m, _LANE), jnp.float32)
    for j in range(row_d // _LANE):
        sl = slice(j * _LANE, (j + 1) * _LANE)
        w = w_ref[:, sl].astype(jnp.float32)
        p = jax.nn.sigmoid(x_ref[:, sl].astype(jnp.float32)) * w
        t = t_ref[:, sl].astype(jnp.float32) * w
        inter = inter + p * t
        ssum = ssum + (p + t)
    inter_ref[...] = jnp.sum(inter, axis=1, keepdims=True)
    sum_ref[...] = jnp.sum(ssum, axis=1, keepdims=True)


# ---------------------------------------------------------------------------
# Tiling selection
# ---------------------------------------------------------------------------

def _pick_row_shape(n, d_pad):
    """View (n, d_pad) as (rows, row_d): row_d is a 128-multiple dividing d_pad."""
    row_d = _LANE
    for cand in range(2048, _LANE - 1, -_LANE):  # widest <= 2048 that divides d_pad
        if d_pad % cand == 0:
            row_d = cand
            break
    # Fill vreg sublanes when the row count would otherwise be tiny.
    while n * (d_pad // row_d) < 8 and row_d % (2 * _LANE) == 0:
        row_d //= 2
    rows = n * (d_pad // row_d)
    return rows, row_d


def _pick_tile_m(rows, row_d, bytes_per_elem, block_target):
    """Return (tile_m, rows_pad). tile_m is a multiple of 8 (or == rows)."""
    if rows <= 8:
        return rows, rows                        # full extent: exempt from 8-rule
    target = block_target // max(1, row_d * bytes_per_elem)
    target = max(8, min(target, rows))
    if rows >= 16:
        # Guarantee >= 2 tiles along the parallel axis so v7x can use both TCs.
        target = min(target, max(8, (rows // 2) // 8 * 8))
    target = max(8, (target // 8) * 8)

    # Largest multiple-of-8 divisor of rows not exceeding the target.
    best = 0
    m = 8
    while m <= target:
        if rows % m == 0:
            best = m
        m += 8
    if best >= max(8, target // 4):              # decent divisor found
        return best, rows
    # No decent divisor: pad rows instead of collapsing to tiny (overhead-bound)
    # tiles.  Padded-row partials are sliced off in the wrapper.
    rows_pad = _round_up(rows, target)
    return target, rows_pad


# ---------------------------------------------------------------------------
# Wrapper
# ---------------------------------------------------------------------------

def dice_loss_pallas(logits, target, weight=None, size_average=True):
    """JAX/Pallas equivalent of DiceLoss().forward(input, target, weight)."""
    n = logits.shape[0]
    d = math.prod(logits.shape[1:])
    block_target, vmem_limit = _tpu_budget()

    streams = [logits.reshape(n, d), target.reshape(n, d)]
    if weight is not None:
        streams.append(weight.reshape(n, d))

    # Pad D to a multiple of 128 so blocks always satisfy the (8,128) rule and
    # stay at the tiling sweet spot.  Padded logits -> sigmoid == 0, padded
    # target/weight == 0, so padded elements contribute nothing to either sum.
    d_pad = _round_up(d, _LANE)
    if d_pad != d:
        fills = [_NEG_FILL, 0.0, 0.0]
        streams = [jnp.pad(s, ((0, 0), (0, d_pad - d)), constant_values=fills[i])
                   for i, s in enumerate(streams)]

    itemsizes = [jnp.dtype(s.dtype).itemsize for s in streams]
    total_bytes = n * d_pad * sum(itemsizes)

    compiler_params = pltpu.CompilerParams(
        dimension_semantics=("parallel",),
        vmem_limit_bytes=int(vmem_limit))

    if total_bytes <= _SMALL_PATH_BYTES:
        # --- Small fused path: one block, per-sample dice score in-kernel. ---
        kernel = _dice_small_w_kernel if weight is not None else _dice_small_kernel
        scores = pl.pallas_call(
            kernel,
            out_shape=jax.ShapeDtypeStruct((n, 1), jnp.float32),
            grid_spec=pltpu.PrefetchScalarGridSpec(
                num_scalar_prefetch=0,
                grid=(1,),
                in_specs=[pl.BlockSpec((n, d_pad), lambda i: (0, 0))] * len(streams),
                out_specs=pl.BlockSpec((n, 1), lambda i: (0, 0))),
            compiler_params=compiler_params,
        )(*streams)[:, 0]
    else:
        # --- General streaming path: parallel grid over complete-row tiles. ---
        rows, row_d = _pick_row_shape(n, d_pad)
        r = d_pad // row_d
        tile_m, rows_pad = _pick_tile_m(rows, row_d, max(itemsizes), block_target)

        views = [s.reshape(rows, row_d) for s in streams]
        if rows_pad != rows:
            views = [jnp.pad(v, ((0, rows_pad - rows), (0, 0))) for v in views]

        kernel = _dice_rows_w_kernel if weight is not None else _dice_rows_kernel
        in_spec = pl.BlockSpec((tile_m, row_d), lambda i: (i, 0))
        out_spec = pl.BlockSpec((tile_m, 1), lambda i: (i, 0))

        inter, sums = pl.pallas_call(
            kernel,
            out_shape=(jax.ShapeDtypeStruct((rows_pad, 1), jnp.float32),
                       jax.ShapeDtypeStruct((rows_pad, 1), jnp.float32)),
            grid_spec=pltpu.PrefetchScalarGridSpec(
                num_scalar_prefetch=0,
                grid=(rows_pad // tile_m,),
                in_specs=[in_spec] * len(views),
                out_specs=[out_spec, out_spec]),
            compiler_params=compiler_params,
        )(*views)

        # Per-sample combine on tiny (n, r) arrays (<= total/128 elements).
        inter_s = jnp.sum(inter[:rows].reshape(n, r), axis=1)
        sum_s = jnp.sum(sums[:rows].reshape(n, r), axis=1)
        scores = 2.0 * (inter_s + 1.0) / (sum_s + 1.0)

    if size_average:
        return 1.0 - jnp.clip(jnp.sum(scores) / n, 0.0, 1.0)
    return 1.0 - scores


# ---------------------------------------------------------------------------
# Self-test
# ---------------------------------------------------------------------------

if __name__ == "__main__":
    master_key = jax.random.PRNGKey(0)

    def ref_loss(xx, tt, ww=None, size_average=True):
        num = xx.shape[0]
        p = jax.nn.sigmoid(xx.astype(jnp.float32)).reshape(num, -1)
        t = tt.astype(jnp.float32).reshape(num, -1)
        if ww is not None:
            wv = ww.astype(jnp.float32).reshape(num, -1)
            p = p * wv
            t = t * wv
        inter = jnp.sum(p * t, axis=1)
        scores = 2.0 * (inter + 1.0) / (jnp.sum(p, axis=1) + jnp.sum(t, axis=1) + 1.0)
        if size_average:
            return 1.0 - jnp.clip(jnp.sum(scores) / num, 0.0, 1.0)
        return 1.0 - scores

    def check(shape, with_weight, size_average, key, tol=1e-5):
        k1, k2, k3 = jax.random.split(key, 3)
        x = jax.random.normal(k1, shape, dtype=jnp.float32)
        tgt = (jax.random.uniform(k2, shape) > 0.5).astype(jnp.float32)
        w = jax.random.uniform(k3, shape, dtype=jnp.float32) if with_weight else None
        got = jax.block_until_ready(
            dice_loss_pallas(x, tgt, weight=w, size_average=size_average))
        want = ref_loss(x, tgt, w, size_average)
        assert jnp.allclose(got, want, atol=tol, rtol=tol), (shape, got, want)

    keys = jax.random.split(master_key, 6)

    # Small fused path (grid of one block; kernel emits per-sample scores).
    check((2, 4, 16, 16), False, True, keys[0])
    check((2, 4, 16, 16), True, True, keys[1])
    check((2, 4, 16, 16), False, False, keys[2])

    # General tiled path, 128-divisible D, >= 2 row tiles (v7x megacore split).
    check((4, 8, 96, 96), False, True, keys[3], tol=1e-4)
    check((4, 8, 96, 96), True, False, keys[4], tol=1e-4)

    # General path with non-128-divisible D (wrapper pads) and awkward row count
    # (rows has no multiple-of-8 divisor -> row padding path).
    check((3, 5, 99, 101), False, True, keys[5], tol=1e-4)

    print("KERNEL_OK")
</pallas_src>

<mosaic_0001>
module attributes {stable_mosaic.version = 11 : i64} {
  func.func @_dice_small_kernel(%arg0: i32, %arg1: memref<2x1024xf32, #tpu.memory_space<vmem>>, %arg2: memref<2x1024xf32, #tpu.memory_space<vmem>>, %arg3: memref<2x1xf32, #tpu.memory_space<vmem>>) attributes {dimension_semantics = [#tpu.dimension_semantics<parallel>], iteration_bounds = array<i64: 1>, scalar_prefetch = 0 : i64, scratch_operands = 0 : i64, tpu.core_type = #tpu.core_type<tc>, window_params = [{pipeline_mode = #tpu.pipeline_mode<synchronous>, transform_indices = @transform_0, window_bounds = array<i64: 2, 1024>}, {pipeline_mode = #tpu.pipeline_mode<synchronous>, transform_indices = @transform_1, window_bounds = array<i64: 2, 1024>}, {pipeline_mode = #tpu.pipeline_mode<synchronous>, transform_indices = @transform_2, window_bounds = array<i64: 2, 1>}]} {
    %c0 = arith.constant 0 : index
    %c0_0 = arith.constant 0 : index
    %0 = vector.load %arg1[%c0, %c0_0] : memref<2x1024xf32, #tpu.memory_space<vmem>>, vector<2x1024xf32>
    %1 = arith.negf %0 : vector<2x1024xf32>
    %2 = math.exp %1 : vector<2x1024xf32>
    %cst = arith.constant 1.000000e+00 : f32
    %3 = vector.broadcast %cst : f32 to vector<2x1024xf32>
    %4 = arith.addf %3, %2 : vector<2x1024xf32>
    %5 = arith.divf %3, %4 : vector<2x1024xf32>
    %c0_1 = arith.constant 0 : index
    %c0_2 = arith.constant 0 : index
    %6 = vector.load %arg2[%c0_1, %c0_2] : memref<2x1024xf32, #tpu.memory_space<vmem>>, vector<2x1024xf32>
    %7 = arith.mulf %5, %6 : vector<2x1024xf32>
    %cst_3 = arith.constant dense<0.000000e+00> : vector<2xf32>
    %8 = vector.multi_reduction <add>, %7, %cst_3 [1] : vector<2x1024xf32> to vector<2xf32>
    %9 = vector.shape_cast %8 : vector<2xf32> to vector<2x1xf32>
    %10 = arith.addf %5, %6 : vector<2x1024xf32>
    %cst_4 = arith.constant dense<0.000000e+00> : vector<2xf32>
    %11 = vector.multi_reduction <add>, %10, %cst_4 [1] : vector<2x1024xf32> to vector<2xf32>
    %12 = vector.shape_cast %11 : vector<2xf32> to vector<2x1xf32>
    %cst_5 = arith.constant 1.000000e+00 : f32
    %13 = vector.broadcast %cst_5 : f32 to vector<2x1xf32>
    %14 = arith.addf %9, %13 : vector<2x1xf32>
    %cst_6 = arith.constant 2.000000e+00 : f32
    %15 = vector.broadcast %cst_6 : f32 to vector<2x1xf32>
    %16 = arith.mulf %15, %14 : vector<2x1xf32>
    %cst_7 = arith.constant 1.000000e+00 : f32
    %17 = vector.broadcast %cst_7 : f32 to vector<2x1xf32>
    %18 = arith.addf %12, %17 : vector<2x1xf32>
    %19 = arith.divf %16, %18 : vector<2x1xf32>
    %c0_8 = arith.constant 0 : index
    %c0_9 = arith.constant 0 : index
    %20 = vector.load %arg3[%c0_8, %c0_9] : memref<2x1xf32, #tpu.memory_space<vmem>>, vector<2x1xf32>
    tpu.vector_store %arg3[%c0_8, %c0_9], %19 {strides = array<i32>} : memref<2x1xf32, #tpu.memory_space<vmem>>, vector<2x1xf32>,
    return
  }
  func.func @transform_0(%arg0: i32) -> (i32, i32) {
    %c0_i32 = arith.constant 0 : i32
    %c0_i32_0 = arith.constant 0 : i32
    %c0_i32_1 = arith.constant 0 : i32
    return %c0_i32, %c0_i32_0 : i32, i32
  }
  func.func @transform_1(%arg0: i32) -> (i32, i32) {
    %c0_i32 = arith.constant 0 : i32
    %c0_i32_0 = arith.constant 0 : i32
    %c0_i32_1 = arith.constant 0 : i32
    return %c0_i32, %c0_i32_0 : i32, i32
  }
  func.func @transform_2(%arg0: i32) -> (i32, i32) {
    %c0_i32 = arith.constant 0 : i32
    %c0_i32_0 = arith.constant 0 : i32
    %c0_i32_1 = arith.constant 0 : i32
    return %c0_i32, %c0_i32_0 : i32, i32
  }
}

</mosaic_0001>

<llo_original>
// kernel: tpu_custom_call.1
$region0: #{tpu_custom_call.1}
  #allocation0 [shape = 'u32[]', space=smem, size = 0x4, offset = 0x4, fixed_abs, tag = 'smem constant byte address 0x4 - core index']
  #allocation1 [shape = 'u32[144,128]{1,0:T(1,128)}', space=vmem, size = 0x12000, scoped, tag = 'internal scratch']
  %s0 = inlined_call_operand.hbm [shape: f32[2,1024], index: 0, kind: input, shape index: {}]
  %s1 = inlined_call_operand.hbm [shape: f32[2,1024], index: 1, kind: input, shape index: {}]
  %s2 = inlined_call_operand.vmem [shape: f32[2,1], index: 2, kind: output, shape index: {}]
  %s3 = sld [smem:[#allocation0]]
  $region26: #{tpu_custom_call.1} parent=0
    _
  %s5 = ssub.s32 1, %s3
  %s6 = scalar_select 0, %s5, %s3
  $region1: #{tpu_custom_call.1} parent=0
    #allocation2 [shape = 'u8[8192]{0}', space=vmem, size = 0x2000, scoped, tag = 'input window, operand 0, single buffered']
    #allocation3 [shape = 's32[1]{0}', space=sflag, size = 0x4, scoped, tag = 'scoped memory for tpu_custom_call.1']
    #allocation4 [shape = 'u8[8192]{0}', space=vmem, size = 0x2000, scoped, tag = 'input window, operand 1, single buffered']
    #allocation5 [shape = 's32[1]{0}', space=sflag, size = 0x4, scoped, tag = 'scoped memory for tpu_custom_call.1']
    %7 = vsyncpa [#allocation3], 0
    %8 = vsyncpa [#allocation5], 0
    // Predicated region
    $region2: #{tpu_custom_call.1} parent=1 // pred_check
      _
    $region3: #{tpu_custom_call.1} parent=1 // pred_check_branch
      %10 = sbr.rel (0) target = $region5
    $region4: #{tpu_custom_call.1} parent=1 // pred_region
      %s12 = ssub.s32 256, 256
      %13 = vsyncadd [#allocation3], %s12
      %s15 = sshll.u32 [#allocation2], 4
      %s16 = int_to_ptr.vmem [resolvable:$true] %s15
      %18 = dma.hbm_to_vmem [thread:$0]  %s0, 256, %s16, [#allocation3]
    $region5: #{tpu_custom_call.1} parent=1 // pred_fallthru
      _
    // Predicated region
    $region6: #{tpu_custom_call.1} parent=1 // pred_check
      _
    $region7: #{tpu_custom_call.1} parent=1 // pred_check_branch
      %20 = sbr.rel (0) target = $region9
    $region8: #{tpu_custom_call.1} parent=1 // pred_region
      %s22 = ssub.s32 256, 256
      %23 = vsyncadd [#allocation5], %s22
      %s25 = sshll.u32 [#allocation4], 4
      %s26 = int_to_ptr.vmem [resolvable:$true] %s25
      %28 = dma.hbm_to_vmem [thread:$0]  %s1, 256, %s26, [#allocation5]
    $region9: #{tpu_custom_call.1} parent=1 // pred_fallthru
      _
    // Predicated region
    $region10: #{tpu_custom_call.1} parent=1 // pred_check
      _
    $region11: #{tpu_custom_call.1} parent=1 // pred_check_branch
      %30 = sbr.rel (0) target = $region13
    $region12: #{tpu_custom_call.1} parent=1 // pred_region
      %31 = dma.done [#allocation3], 256
    $region13: #{tpu_custom_call.1} parent=1 // pred_fallthru
      _
    // Predicated region
    $region14: #{tpu_custom_call.1} parent=1 // pred_check
      _
    $region15: #{tpu_custom_call.1} parent=1 // pred_check_branch
      %33 = sbr.rel (0) target = $region17
    $region16: #{tpu_custom_call.1} parent=1 // pred_region
      %34 = dma.done [#allocation5], 256
    $region17: #{tpu_custom_call.1} parent=1 // pred_fallthru
      _
    %v35 = vld [vmem:[#allocation2] sm:$0xff]
    %v36 = vld [vmem:[#allocation2 + $0x8] sm:$0xff]
    %v37 = vxor.u32 %v35, 2147483648
    %v38 = vxor.u32 %v36, 2147483648
    %v39 = vmul.f32 %v37, 1.442695
    %v40 = vpow.pop %v39
    %v41 = vmul.f32 %v38, 1.442695
    %v42 = vpow.pop %v41
    %v43 = vadd.f32 %v40, 1.0
    %v44 = vadd.f32 %v42, 1.0
    %v45 = vrcp.pop %v43
    %v46 = vmul.f32 1.0, %v45
    %v47 = vrcp.pop %v44
    %v48 = vmul.f32 1.0, %v47
    %v49 = vld [vmem:[#allocation4] sm:$0xff]
    %v50 = vld [vmem:[#allocation4 + $0x8] sm:$0xff]
    %v51 = vmul.f32 %v46, %v49
    %v52 = vmul.f32 %v48, %v50
    %v55 = vcombine.high %v51, %v51
    %v57 = vunpack.c.l.s4 1983009808
    %v58 = vunpack.c.0.s8 %v57
    %v59 = vlaneseq
    %v60 = vshrl.u32 %v59, 7
    %v61 = vsub.s32 %v58, %v60
    %v62 = vrot.slane %v51, %v61
    %v64 = vunpack.c.l.s4 1983009808
    %v65 = vunpack.c.0.s8 %v64
    %v66 = vlaneseq
    %v67 = vshrl.u32 %v66, 7
    %v68 = vsub.s32 %v65, %v67
    %v69 = vrot.slane %v55, %v68
    %v70 = vcombine.high %v62, %v62
    %v71 = vcombine.high %v69, %v69
    %v72 = vcombine.high %v52, %v52
    %v74 = vunpack.c.l.s4 1983009808
    %v75 = vunpack.c.0.s8 %v74
    %v76 = vlaneseq
    %v77 = vshrl.u32 %v76, 7
    %v78 = vsub.s32 %v75, %v77
    %v79 = vrot.slane %v52, %v78
    %v81 = vunpack.c.l.s4 1983009808
    %v82 = vunpack.c.0.s8 %v81
    %v83 = vlaneseq
    %v84 = vshrl.u32 %v83, 7
    %v85 = vsub.s32 %v82, %v84
    %v86 = vrot.slane %v72, %v85
    %v87 = vcombine.high %v79, %v79
    %v88 = vcombine.high %v86, %v86
    %vm97 = vcmask 1041408
    %v98 = vsel %vm97, %v62, 0.0
    %v99 = vsel %vm97, %v70, 0.0
    %v100 = vadd.f32 %v98, %v99
    %v101 = vsel %vm97, %v69, 0.0
    %v102 = vadd.f32 %v100, %v101
    %v103 = vsel %vm97, %v71, 0.0
    %v104 = vadd.f32 %v102, %v103
    %v105 = vsel %vm97, %v79, 0.0
    %v106 = vadd.f32 %v104, %v105
    %v107 = vsel %vm97, %v87, 0.0
    %v108 = vadd.f32 %v106, %v107
    %v109 = vsel %vm97, %v86, 0.0
    %v110 = vadd.f32 %v108, %v109
    %v111 = vsel %vm97, %v88, 0.0
    %v112 = vadd.f32 %v110, %v111
    %113 = vadd.xlane.f32.xlu0 %v112
    %v114 = vpop.xlane.xlu0 %113
    %v115 = vadd.f32 %v46, %v49
    %v116 = vadd.f32 %v48, %v50
    %v119 = vcombine.high %v115, %v115
    %v121 = vunpack.c.l.s4 1983009808
    %v122 = vunpack.c.0.s8 %v121
    %v123 = vlaneseq
    %v124 = vshrl.u32 %v123, 7
    %v125 = vsub.s32 %v122, %v124
    %v126 = vrot.slane %v115, %v125
    %v128 = vunpack.c.l.s4 1983009808
    %v129 = vunpack.c.0.s8 %v128
    %v130 = vlaneseq
    %v131 = vshrl.u32 %v130, 7
    %v132 = vsub.s32 %v129, %v131
    %v133 = vrot.slane %v119, %v132
    %v134 = vcombine.high %v126, %v126
    %v135 = vcombine.high %v133, %v133
    %v136 = vcombine.high %v116, %v116
    %v138 = vunpack.c.l.s4 1983009808
    %v139 = vunpack.c.0.s8 %v138
    %v140 = vlaneseq
    %v141 = vshrl.u32 %v140, 7
    %v142 = vsub.s32 %v139, %v141
    %v143 = vrot.slane %v116, %v142
    %v145 = vunpack.c.l.s4 1983009808
    %v146 = vunpack.c.0.s8 %v145
    %v147 = vlaneseq
    %v148 = vshrl.u32 %v147, 7
    %v149 = vsub.s32 %v146, %v148
    %v150 = vrot.slane %v136, %v149
    %v151 = vcombine.high %v143, %v143
    %v152 = vcombine.high %v150, %v150
    %v161 = vsel %vm97, %v126, 0.0
    %v162 = vsel %vm97, %v134, 0.0
    %v163 = vadd.f32 %v161, %v162
    %v164 = vsel %vm97, %v133, 0.0
    %v165 = vadd.f32 %v163, %v164
    %v166 = vsel %vm97, %v135, 0.0
    %v167 = vadd.f32 %v165, %v166
    %v168 = vsel %vm97, %v143, 0.0
    %v169 = vadd.f32 %v167, %v168
    %v170 = vsel %vm97, %v151, 0.0
    %v171 = vadd.f32 %v169, %v170
    %v172 = vsel %vm97, %v150, 0.0
    %v173 = vadd.f32 %v171, %v172
    %v174 = vsel %vm97, %v152, 0.0
    %v175 = vadd.f32 %v173, %v174
    %176 = vadd.xlane.f32.xlu0 %v175
    %v177 = vpop.xlane.xlu0 %176
    %v178 = vadd.f32 %v114, 1.0
    %v179 = vmul.f32 %v178, 2.0
    %v180 = vadd.f32 %v177, 1.0
    %v181 = vrcp.pop %v180
    %v182 = vmul.f32 %v179, %v181
    %vm183 = vcmask 1024
    %184 = vst.msk [vmem:[%s2] sm:$0x3] %vm183, %v182
    // Predicated region
    $region18: #{tpu_custom_call.1} parent=1 // pred_check
      _
    $region19: #{tpu_custom_call.1} parent=1 // pred_check_branch
      %186 = sbr.rel (0) target = $region21
    $region20: #{tpu_custom_call.1} parent=1 // pred_region
      _
    $region21: #{tpu_custom_call.1} parent=1 // pred_fallthru
      _
    // Predicated region
    $region22: #{tpu_custom_call.1} parent=1 // pred_check
      _
    $region23: #{tpu_custom_call.1} parent=1 // pred_check_branch
      %188 = sbr.rel (0) target = $region25
    $region24: #{tpu_custom_call.1} parent=1 // pred_region
      _
    $region25: #{tpu_custom_call.1} parent=1 // pred_fallthru
      _
    %189 = vsyncpa [#allocation3], 1
    %190 = vsyncpa [#allocation5], 1

</llo_original>
